<compile_context>
chip_gen: v7x
topology: tpu7x:2x2x1
jax: 0.10.0
libtpu: 0.0.40
codegen_flags: <defaults>
</compile_context>

<pallas_src>
import functools

import jax
import jax.numpy as jnp
from jax.experimental import pallas as pl
from jax.experimental.pallas import tpu as pltpu


# Per-element VMEM footprint (bytes) of one (TILE_N, C) row-tile:
#   2 * itemsize  : double-buffered input DMA tile
#   ~4 * 4        : f32 temporaries inside the kernel (x_f32, shifted, exp, select)
_VMEM_TILE_BUDGET = 24 * 1024 * 1024   # peak tile footprint target (fits every generation)
_VMEM_LIMIT_BYTES = 32 * 1024 * 1024   # explicit: > v5e's 16 MiB default, == v6e/v7x default
_MAX_TILE_N = 1024                     # amortizes ~0.35us/step grid overhead; more buys little


def _choose_tile_n(n, c, itemsize):
    per_row = c * (2 * itemsize + 4 * 4)
    budget_rows = max(1, _VMEM_TILE_BUDGET // max(1, per_row))
    cap = min(_MAX_TILE_N, budget_rows)
    if n <= cap:
        return n                       # single block == full batch extent (always legal)
    tile = cap // 8 * 8
    # TODO(synk): C-tiling / online softmax for huge C; for now fall back to 8-row tiles.
    return max(8, tile)


def _focal_rows_kernel(x_ref, t_ref, o_ref, *, alpha, gamma, n_rows, tile_n):
    """Per-example focal loss for one (TILE_N, C) tile -> (TILE_N, 1) f32 column."""
    pid = pl.program_id(0)
    x = x_ref[...].astype(jnp.float32)      # per-tile cast (bf16 only pays DMA, not HBM pre-cast)
    t = t_ref[...]                          # (T, 1) int32 targets

    # Numerically stable log-softmax pieces; the full (T, C) log_probs is never built:
    #   target_log_prob = gather(shifted, target) - logsumexp(shifted)
    m = jnp.max(x, axis=-1, keepdims=True)
    shifted = x - m
    lse = jnp.log(jnp.sum(jnp.exp(shifted), axis=-1, keepdims=True))

    cls = jax.lax.broadcasted_iota(jnp.int32, x.shape, 1)
    t_shift = jnp.sum(jnp.where(cls == t, shifted, 0.0), axis=-1, keepdims=True)
    tlp = t_shift - lse                     # (T, 1) target log-prob

    p = jnp.exp(tlp)
    w = jnp.maximum(1.0 - p, 0.0)           # clamp guards pow() for non-integer gamma
    g = float(gamma)
    if g == int(g) and 0 <= int(g) <= 8:
        wg = jnp.ones_like(w)
        for _ in range(int(g)):             # integer gamma -> plain VPU multiplies
            wg = wg * w
    else:
        wg = w ** jnp.float32(g)            # non-integer gamma -> EUP pow on clamped base
    focal = -jnp.float32(alpha) * wg * tlp  # (T, 1)

    # Ragged last tile (no wrapper pad): rows >= n_rows hold garbage input; zero them.
    # (Their slice of the output store is outside the array and discarded anyway.)
    row = jax.lax.broadcasted_iota(jnp.int32, focal.shape, 0) + pid * tile_n
    o_ref[...] = jnp.where(row < n_rows, focal, 0.0)


def focal_loss(inputs, targets, *, alpha=1.0, gamma=2.0, reduction="mean", tile_n=None):
    """inputs: (N, C) float logits (f32 or bf16); targets: (N,) int class indices."""
    n, c = inputs.shape
    itemsize = jnp.dtype(inputs.dtype).itemsize
    if tile_n is None:
        tile_n = _choose_tile_n(n, c, itemsize)
    num_tiles = pl.cdiv(n, tile_n)

    t2 = targets.astype(jnp.int32).reshape(n, 1)

    kernel = functools.partial(
        _focal_rows_kernel, alpha=float(alpha), gamma=float(gamma),
        n_rows=n, tile_n=tile_n)

    per_row = pl.pallas_call(
        kernel,
        out_shape=jax.ShapeDtypeStruct((n, 1), jnp.float32),
        grid=(num_tiles,),
        in_specs=[
            pl.BlockSpec((tile_n, c), lambda i: (i, 0)),   # logits tile (full class row)
            pl.BlockSpec((tile_n, 1), lambda i: (i, 0)),   # targets tile
        ],
        out_specs=pl.BlockSpec((tile_n, 1), lambda i: (i, 0)),
        compiler_params=pltpu.CompilerParams(
            dimension_semantics=("parallel",),
            vmem_limit_bytes=_VMEM_LIMIT_BYTES),
    )(inputs, t2)

    per_row = per_row[:, 0]
    if reduction == "mean":
        return jnp.mean(per_row)
    if reduction == "sum":
        return jnp.sum(per_row)
    return per_row


def _focal_loss_ref(inputs, targets, alpha=1.0, gamma=2.0, reduction="mean"):
    log_probs = jax.nn.log_softmax(inputs.astype(jnp.float32), axis=-1)
    tlp = jnp.take_along_axis(log_probs, targets[:, None], axis=1)[:, 0]
    probs = jnp.exp(tlp)
    fl = -alpha * (1.0 - probs) ** gamma * tlp
    if reduction == "mean":
        return fl.mean()
    if reduction == "sum":
        return fl.sum()
    return fl


if __name__ == "__main__":
    key = jax.random.PRNGKey(0)
    k1, k2, k3, k4 = jax.random.split(key, 4)

    N, C = 8, 32  # small synthetic shapes: batch=8, num_classes=32
    logits = jax.random.normal(k1, (N, C), dtype=jnp.float32)
    targets = jax.random.randint(k2, (N,), 0, C, dtype=jnp.int32)

    # Primary path: module defaults (alpha=1, gamma=2, reduction='mean').
    loss = jax.block_until_ready(focal_loss(logits, targets, alpha=1.0, gamma=2.0,
                                            reduction="mean"))
    ref = _focal_loss_ref(logits, targets, 1.0, 2.0, "mean")
    assert jnp.allclose(loss, ref, atol=1e-5, rtol=1e-5), (loss, ref)

    # 'sum' reduction.
    s = jax.block_until_ready(focal_loss(logits, targets, reduction="sum"))
    s_ref = _focal_loss_ref(logits, targets, reduction="sum")
    assert jnp.allclose(s, s_ref, atol=1e-5, rtol=1e-5), (s, s_ref)

    # 'none' reduction (per-example column output path).
    per = jax.block_until_ready(focal_loss(logits, targets, reduction="none"))
    per_ref = _focal_loss_ref(logits, targets, reduction="none")
    assert jnp.allclose(per, per_ref, atol=1e-5, rtol=1e-5), (per, per_ref)

    # bf16 logits path: kernel casts per-tile, wrapper does no HBM-wide pre-cast.
    lb = jax.block_until_ready(
        focal_loss(logits.astype(jnp.bfloat16), targets, reduction="mean"))
    lb_ref = _focal_loss_ref(logits.astype(jnp.bfloat16), targets, reduction="mean")
    assert jnp.allclose(lb, lb_ref, atol=1e-4, rtol=1e-4), (lb, lb_ref)

    # Ragged (no-pad) multi-tile path: N not divisible by tile_n -> masked last block.
    N2 = 200
    logits2 = jax.random.normal(k3, (N2, C), dtype=jnp.float32)
    targets2 = jax.random.randint(k4, (N2,), 0, C, dtype=jnp.int32)
    for red in ("mean", "sum", "none"):
        got = jax.block_until_ready(focal_loss(logits2, targets2, reduction=red, tile_n=64))
        want = _focal_loss_ref(logits2, targets2, reduction=red)
        assert jnp.allclose(got, want, atol=1e-5, rtol=1e-5), (red, got, want)

    print("KERNEL_OK")
</pallas_src>

<mosaic_0001>
module attributes {stable_mosaic.version = 11 : i64} {
  func.func @_focal_rows_kernel(%arg0: i32, %arg1: memref<8x32xf32, #tpu.memory_space<vmem>>, %arg2: memref<8x1xi32, #tpu.memory_space<vmem>>, %arg3: memref<8x1xf32, #tpu.memory_space<vmem>>) attributes {dimension_semantics = [#tpu.dimension_semantics<parallel>], iteration_bounds = array<i64: 1>, scalar_prefetch = 0 : i64, scratch_operands = 0 : i64, tpu.core_type = #tpu.core_type<tc>, window_params = [{transform_indices = @transform_0, window_bounds = array<i64: 8, 32>}, {transform_indices = @transform_1, window_bounds = array<i64: 8, 1>}, {transform_indices = @transform_2, window_bounds = array<i64: 8, 1>}]} {
    %c0 = arith.constant 0 : index
    %c0_0 = arith.constant 0 : index
    %0 = vector.load %arg1[%c0, %c0_0] : memref<8x32xf32, #tpu.memory_space<vmem>>, vector<8x32xf32>
    %c0_1 = arith.constant 0 : index
    %c0_2 = arith.constant 0 : index
    %1 = vector.load %arg2[%c0_1, %c0_2] : memref<8x1xi32, #tpu.memory_space<vmem>>, vector<8x1xi32>
    %cst = arith.constant dense<0xFF800000> : vector<8xf32>
    %2 = vector.multi_reduction <maximumf>, %0, %cst [1] : vector<8x32xf32> to vector<8xf32>
    %3 = vector.shape_cast %2 : vector<8xf32> to vector<8x1xf32>
    %4 = vector.broadcast %3 : vector<8x1xf32> to vector<8x32xf32>
    %5 = arith.subf %0, %4 : vector<8x32xf32>
    %6 = math.exp %5 : vector<8x32xf32>
    %cst_3 = arith.constant dense<0.000000e+00> : vector<8xf32>
    %7 = vector.multi_reduction <add>, %6, %cst_3 [1] : vector<8x32xf32> to vector<8xf32>
    %8 = vector.shape_cast %7 : vector<8xf32> to vector<8x1xf32>
    %9 = math.log %8 : vector<8x1xf32>
    %10 = tpu.iota {dimensions = array<i32: 1>} : vector<8x32xi32>
    %11 = vector.broadcast %1 : vector<8x1xi32> to vector<8x32xi32>
    %12 = arith.cmpi eq, %10, %11 : vector<8x32xi32>
    %cst_4 = arith.constant 0.000000e+00 : f32
    %13 = vector.broadcast %cst_4 : f32 to vector<8x32xf32>
    %14 = arith.select %12, %5, %13 : vector<8x32xi1>, vector<8x32xf32>
    %cst_5 = arith.constant dense<0.000000e+00> : vector<8xf32>
    %15 = vector.multi_reduction <add>, %14, %cst_5 [1] : vector<8x32xf32> to vector<8xf32>
    %16 = vector.shape_cast %15 : vector<8xf32> to vector<8x1xf32>
    %17 = arith.subf %16, %9 : vector<8x1xf32>
    %18 = math.exp %17 : vector<8x1xf32>
    %cst_6 = arith.constant 1.000000e+00 : f32
    %19 = vector.broadcast %cst_6 : f32 to vector<8x1xf32>
    %20 = arith.subf %19, %18 : vector<8x1xf32>
    %cst_7 = arith.constant 0.000000e+00 : f32
    %21 = vector.broadcast %cst_7 : f32 to vector<8x1xf32>
    %22 = arith.maximumf %20, %21 : vector<8x1xf32>
    %cst_8 = arith.constant 1.000000e+00 : f32
    %23 = vector.broadcast %cst_8 : f32 to vector<8x1xf32>
    %24 = arith.mulf %23, %22 : vector<8x1xf32>
    %25 = arith.mulf %24, %22 : vector<8x1xf32>
    %cst_9 = arith.constant 0.000000e+00 : f32
    %cst_10 = arith.constant 1.000000e+00 : f32
    %26 = arith.subf %cst_9, %cst_10 : f32
    %27 = vector.broadcast %26 : f32 to vector<8x1xf32>
    %28 = arith.mulf %27, %25 : vector<8x1xf32>
    %29 = arith.mulf %28, %17 : vector<8x1xf32>
    %30 = tpu.iota {dimensions = array<i32: 0>} : vector<8x1xi32>
    %c8_i32 = arith.constant 8 : i32
    %31 = arith.muli %arg0, %c8_i32 : i32
    %32 = vector.broadcast %31 : i32 to vector<8x1xi32>
    %33 = arith.addi %30, %32 : vector<8x1xi32>
    %c8_i32_11 = arith.constant 8 : i32
    %34 = vector.broadcast %c8_i32_11 : i32 to vector<8x1xi32>
    %35 = arith.cmpi slt, %33, %34 : vector<8x1xi32>
    %cst_12 = arith.constant 0.000000e+00 : f32
    %36 = vector.broadcast %cst_12 : f32 to vector<8x1xf32>
    %37 = arith.select %35, %29, %36 : vector<8x1xi1>, vector<8x1xf32>
    %c0_13 = arith.constant 0 : index
    %c0_14 = arith.constant 0 : index
    %38 = vector.load %arg3[%c0_13, %c0_14] : memref<8x1xf32, #tpu.memory_space<vmem>>, vector<8x1xf32>
    tpu.vector_store %arg3[%c0_13, %c0_14], %37 {strides = array<i32>} : memref<8x1xf32, #tpu.memory_space<vmem>>, vector<8x1xf32>,
    return
  }
  func.func @transform_0(%arg0: i32) -> (i32, i32) {
    %c0_i32 = arith.constant 0 : i32
    %c0_i32_0 = arith.constant 0 : i32
    return %arg0, %c0_i32 : i32, i32
  }
  func.func @transform_1(%arg0: i32) -> (i32, i32) {
    %c0_i32 = arith.constant 0 : i32
    %c0_i32_0 = arith.constant 0 : i32
    return %arg0, %c0_i32 : i32, i32
  }
  func.func @transform_2(%arg0: i32) -> (i32, i32) {
    %c0_i32 = arith.constant 0 : i32
    %c0_i32_0 = arith.constant 0 : i32
    return %arg0, %c0_i32 : i32, i32
  }
}

</mosaic_0001>

<llo_original>
// kernel: tpu_custom_call.1
$region0: #{tpu_custom_call.1}
  #allocation0 [shape = 'u32[]', space=smem, size = 0x4, offset = 0x4, fixed_abs, tag = 'smem constant byte address 0x4 - core index']
  #allocation1 [shape = 'u32[144,128]{1,0:T(1,128)}', space=vmem, size = 0x12000, scoped, tag = 'internal scratch']
  %s0 = inlined_call_operand.vmem [shape: f32[8,32], index: 0, kind: input, shape index: {}]
  %s1 = inlined_call_operand.vmem [shape: s32[8,1], index: 1, kind: input, shape index: {}]
  %s2 = inlined_call_operand.vmem [shape: f32[8,1], index: 2, kind: output, shape index: {}]
  %s3 = sld [smem:[#allocation0]]
  $region18: #{tpu_custom_call.1} parent=0
    _
  %s5 = ssub.s32 1, %s3
  %s6 = scalar_select 0, %s5, %s3
  // Predicated region
  $region2: #{tpu_custom_call.1} parent=0 // pred_check
    _
  $region3: #{tpu_custom_call.1} parent=0 // pred_check_branch
    %8 = sbr.rel (0) target = $region5
  $region4: #{tpu_custom_call.1} parent=0 // pred_region
    _
  $region5: #{tpu_custom_call.1} parent=0 // pred_fallthru
    _
  // Predicated region
  $region6: #{tpu_custom_call.1} parent=0 // pred_check
    _
  $region7: #{tpu_custom_call.1} parent=0 // pred_check_branch
    %10 = sbr.rel (0) target = $region9
  $region8: #{tpu_custom_call.1} parent=0 // pred_region
    _
  $region9: #{tpu_custom_call.1} parent=0 // pred_fallthru
    _
  %v11 = vld [vmem:[%s0] sm:$0xff]
  %v12 = vld [vmem:[%s1] sm:$0xff]
  %vm13 = vcmask 261120
  %v14 = vsel %vm13, %v11, -inf
  %15 = vmax.xlane.f32.xlu0 %v14
  %v16 = vpop.xlane.xlu0 %15
  %v17 = vsub.f32 %v11, %v16
  %v18 = vmul.f32 %v17, 1.442695
  %v19 = vpow.pop %v18
  %v20 = vsel %vm13, %v19, 0.0
  %21 = vadd.xlane.f32.xlu0 %v20
  %v22 = vpop.xlane.xlu0 %21
  %v23 = vlog2.pop %v22
  %v24 = vmul.f32 %v23, 0.6931472
  %v25 = vlaneseq
  %v26 = vand.u32 %v25, 127
  %27 = vset.pattern.permute.xlu0 0
  %28 = vperm.xlu0 %27, %v12
  %v29 = vpop.permute.xlu0 %28
  %vm30 = vcmp.eq.s32.totalorder %v26, %v29
  %v31 = vsel %vm30, %v17, 0.0
  %v32 = vsel %vm13, %v31, 0.0
  %33 = vadd.xlane.f32.xlu0 %v32
  %v34 = vpop.xlane.xlu0 %33
  %v35 = vsub.f32 %v34, %v24
  %v36 = vmul.f32 %v35, 1.442695
  %v37 = vpow.pop %v36
  %v38 = vsub.f32 1.0, %v37
  %v39 = vmax.f32 %v38, 0.0
  %v40 = vmul.f32 %v39, %v39
  %v41 = vmul.f32 %v40, -1.0
  %v42 = vmul.f32 %v41, %v35
  %v43 = vlaneseq
  %v44 = vshrl.u32 %v43, 7
  %s45 = smul.u32 0, 8
  %v46 = vstv %s45
  %v47 = vadd.s32 %v44, %v46
  %vm48 = vcmp.lt.s32.totalorder %v47, 8
  %v49 = vsel %vm48, %v42, 0.0
  %vm50 = vcmask 7168
  %51 = vst.msk [vmem:[%s2] sm:$0xff] %vm50, %v49
  // Predicated region
  $region10: #{tpu_custom_call.1} parent=0 // pred_check
    _
  $region11: #{tpu_custom_call.1} parent=0 // pred_check_branch
    %53 = sbr.rel (0) target = $region13
  $region12: #{tpu_custom_call.1} parent=0 // pred_region
    _
  $region13: #{tpu_custom_call.1} parent=0 // pred_fallthru
    _
  // Predicated region
  $region14: #{tpu_custom_call.1} parent=0 // pred_check
    _
  $region15: #{tpu_custom_call.1} parent=0 // pred_check_branch
    %55 = sbr.rel (0) target = $region17
  $region16: #{tpu_custom_call.1} parent=0 // pred_region
    _
  $region17: #{tpu_custom_call.1} parent=0 // pred_fallthru
    _

</llo_original>
